<compile_context>
chip_gen: v6e
topology: v6e:2x2x1
jax: 0.10.0
libtpu: 0.0.40
codegen_flags: <defaults>
</compile_context>

<pallas_src>
import functools

import numpy as np
import jax
import jax.numpy as jnp
from jax.experimental import pallas as pl
from jax.experimental.pallas import tpu as pltpu

_LANE = 128
_TILE_LANES_MAX = 256 * 1024            # upper bound on lanes per grid step


def _round_up(v, m):
    return (v + m - 1) // m * m


def _physical_vmem_bytes():
    """Per-TensorCore VMEM (128 MiB on v5e/v6e, 64 MiB on v7x)."""
    try:
        info = pltpu.get_tpu_info()
        cap = getattr(info, "vmem_capacity_bytes", None)
        if cap:
            return int(cap)
    except Exception:
        pass
    return 64 * 1024 * 1024             # conservative fallback (v7x-sized)


_VMEM_PHYSICAL = _physical_vmem_bytes()
_VMEM_LIMIT = int(_VMEM_PHYSICAL * 0.70)        # scoped limit requested from Mosaic
_VMEM_BLOCK_BUDGET = int(_VMEM_LIMIT * 0.75)    # budget for pipelined block buffers
_RESIDENT_MAX_BYTES = _VMEM_LIMIT // 4          # whole-slab-in-VMEM fit fast path


def _max_tile_lanes(c):
    """Largest lane tile s.t. 4 (c, tile) f32 buffers (in+out, double-buffered) fit."""
    cap = _VMEM_BLOCK_BUDGET // (16 * c)
    cap = max(_LANE, (cap // _LANE) * _LANE)
    return min(cap, _TILE_LANES_MAX)


def _choose_tiling(c, n_cols):
    """Pick (tile_n, num_tiles, n_pad) for a (c, n_cols) slab.

    Prefers >= 2 tiles so a 'parallel' grid axis can shard across v7x's two
    TensorCores, while keeping tiles as large as the VMEM budget allows."""
    n128 = _round_up(max(int(n_cols), 1), _LANE)
    cap = _max_tile_lanes(c)
    num_tiles = max(1, -(-n128 // cap))
    if num_tiles == 1 and n128 >= 2 * _LANE:
        num_tiles = 2
    tile_n = _round_up(-(-n128 // num_tiles), _LANE)
    return tile_n, num_tiles, tile_n * num_tiles


# ----------------------------- Pallas kernels ------------------------------ #

def _fit_resident_kernel(x_hbm, cnt_ref, o_hbm, loc_ref, scale_ref, buf, sem):
    """Whole-slab resident fit_transform.

    The slab is DMA'd HBM->VMEM once; mean and a *two-pass* centered variance
    are computed in VMEM (the alignment/padding columns are exact zeros, so
    their (0 - mean)^2 contribution is removed analytically via (total - cnt));
    the slab is normalized in place and DMA'd back to the aliased output.
    No scale==0 / cnt==1 guard: inf/NaN, like torch."""
    cp_in = pltpu.make_async_copy(x_hbm, buf, sem)
    cp_in.start()
    cp_in.wait()

    x = buf[...]                                     # (c, n_pad)
    cnt = cnt_ref[...]                               # (c, 1) valid sample count
    total = float(buf.shape[-1])                     # static python float

    loc = jnp.sum(x, axis=1, keepdims=True) / cnt
    d = x - loc
    ssq = jnp.sum(d * d, axis=1, keepdims=True) - (total - cnt) * (loc * loc)
    scale = jnp.sqrt(ssq / (cnt - 1.0))              # unbiased, like torch.std
    inv = pl.reciprocal(scale)                       # exact; multiply, not divide

    loc_ref[...] = loc
    scale_ref[...] = scale
    buf[...] = d * inv

    cp_out = pltpu.make_async_copy(buf, o_hbm, sem)
    cp_out.start()
    cp_out.wait()


def _partial_stats_kernel(x_ref, sum_ref, ssq_ref):
    """Per-tile partial sum / sum-of-squares (tiled fit fallback, pass A).

    Each grid step writes its own (c, 128) output block (lane 0..127 all hold
    the same value); the tiny partials are combined in float64 on host."""
    x = x_ref[...]                                   # (c, tile_n)
    s = jnp.sum(x, axis=1, keepdims=True)            # (c, 1)
    q = jnp.sum(x * x, axis=1, keepdims=True)
    sum_ref[...] = jnp.broadcast_to(s, sum_ref.shape)
    ssq_ref[...] = jnp.broadcast_to(q, ssq_ref.shape)


def _transform_kernel(x_ref, loc_ref, inv_ref, o_ref):
    """StandardScaler.transform: (x - loc) * (1/scale), reciprocal precomputed."""
    o_ref[...] = (x_ref[...] - loc_ref[...]) * inv_ref[...]


# ------------------------------ wrappers ----------------------------------- #

@functools.partial(jax.jit, donate_argnums=(0,))
def scaler_fit_transform_resident(x, cnt):
    """Resident fit_transform on a (c, n_pad) slab. Returns (out, loc, scale)."""
    c, n_pad = x.shape
    return pl.pallas_call(
        _fit_resident_kernel,
        out_shape=(jax.ShapeDtypeStruct((c, n_pad), jnp.float32),
                   jax.ShapeDtypeStruct((c, 1), jnp.float32),
                   jax.ShapeDtypeStruct((c, 1), jnp.float32)),
        grid=(1,),
        in_specs=[pl.BlockSpec(memory_space=pl.ANY),          # slab stays in HBM
                  pl.BlockSpec((c, 1), lambda i: (0, 0))],
        out_specs=(pl.BlockSpec(memory_space=pl.ANY),
                   pl.BlockSpec((c, 1), lambda i: (0, 0)),
                   pl.BlockSpec((c, 1), lambda i: (0, 0))),
        scratch_shapes=[pltpu.VMEM((c, n_pad), jnp.float32),
                        pltpu.SemaphoreType.DMA(())],
        input_output_aliases={0: 0},                          # slab rewritten in place
        compiler_params=pltpu.CompilerParams(
            dimension_semantics=("arbitrary",),
            vmem_limit_bytes=_VMEM_LIMIT),
    )(x, cnt)


@functools.partial(jax.jit, static_argnames=("tile_n",))
def scaler_partial_stats(x, *, tile_n):
    """Tiled fit fallback, pass A: per-tile (sum, sumsq) partials, parallel grid."""
    c, n_pad = x.shape
    num_tiles = n_pad // tile_n
    return pl.pallas_call(
        _partial_stats_kernel,
        out_shape=(jax.ShapeDtypeStruct((c, num_tiles * _LANE), jnp.float32),
                   jax.ShapeDtypeStruct((c, num_tiles * _LANE), jnp.float32)),
        grid=(num_tiles,),
        in_specs=[pl.BlockSpec((c, tile_n), lambda t: (0, t))],
        out_specs=(pl.BlockSpec((c, _LANE), lambda t: (0, t)),
                   pl.BlockSpec((c, _LANE), lambda t: (0, t))),
        compiler_params=pltpu.CompilerParams(
            dimension_semantics=("parallel",),
            vmem_limit_bytes=_VMEM_LIMIT),
    )(x)


def _combine_stats(psum, pssq, cnt):
    """Combine per-tile partials in float64 on host -> (loc, scale) float32."""
    ps = np.asarray(psum, dtype=np.float64)[:, ::_LANE]       # (c, num_tiles)
    pq = np.asarray(pssq, dtype=np.float64)[:, ::_LANE]
    cnt64 = np.asarray(cnt, dtype=np.float64).reshape(-1)
    s = ps.sum(axis=1)
    q = pq.sum(axis=1)
    loc = s / cnt64
    var = (q - cnt64 * loc * loc) / (cnt64 - 1.0)
    return loc.astype(np.float32), np.sqrt(var).astype(np.float32)


@functools.partial(jax.jit, static_argnames=("tile_n",), donate_argnums=(0,))
def scaler_transform(x, loc, inv, *, tile_n):
    """Elementwise (x - loc) * inv on the channel-major slab. Input aliased to
    the output; grid axis 'parallel' (megacore on v7x)."""
    c, n_pad = x.shape
    num_tiles = n_pad // tile_n
    return pl.pallas_call(
        _transform_kernel,
        out_shape=jax.ShapeDtypeStruct((c, n_pad), jnp.float32),
        grid=(num_tiles,),
        in_specs=[pl.BlockSpec((c, tile_n), lambda t: (0, t)),
                  pl.BlockSpec((c, 1), lambda t: (0, 0)),
                  pl.BlockSpec((c, 1), lambda t: (0, 0))],
        out_specs=pl.BlockSpec((c, tile_n), lambda t: (0, t)),
        input_output_aliases={0: 0},
        compiler_params=pltpu.CompilerParams(
            dimension_semantics=("parallel",),
            vmem_limit_bytes=_VMEM_LIMIT),
    )(x, loc, inv)


# ------------------------------ Preprocess --------------------------------- #

class Preprocess:
    """JAX/Pallas port of florah Preprocess (StandardScaler with dim=[0, 1])."""

    def __init__(self, nx, ny, nt=1, sub_dim=None, use_dt=False, use_t=False):
        self.nx, self.ny, self.nt = nx, ny, nt
        self.sub_dim = list(sub_dim) if sub_dim is not None else []
        self.c_total = nx + ny + nt
        # fused per-channel scaler state (torch buffer defaults: loc=0, scale=1)
        self._loc = jnp.zeros((self.c_total, 1), jnp.float32)
        self._scale = jnp.ones((self.c_total, 1), jnp.float32)
        self._inv = jnp.ones((self.c_total, 1), jnp.float32)

    # expose per-scaler buffers like the torch module's StandardScaler buffers
    @property
    def x_loc(self): return self._loc[:self.nx, 0]
    @property
    def x_scale(self): return self._scale[:self.nx, 0]
    @property
    def y_loc(self): return self._loc[self.nx:self.nx + self.ny, 0]
    @property
    def y_scale(self): return self._scale[self.nx:self.nx + self.ny, 0]
    @property
    def t_loc(self): return self._loc[self.nx + self.ny:, 0]
    @property
    def t_scale(self): return self._scale[self.nx + self.ny:, 0]

    def _set_stats(self, loc, scale):
        loc = jnp.asarray(loc, jnp.float32).reshape(self.c_total, 1)
        scale = jnp.asarray(scale, jnp.float32).reshape(self.c_total, 1)
        self._loc, self._scale = loc, scale
        self._inv = (1.0 / scale).astype(jnp.float32)

    def __call__(self, data, fit=True):
        return self.transform(data, fit=fit)

    def transform(self, data, fit=True):
        trees = data["x"]
        x = [np.asarray(trees[i], np.float32)[:-1] for i in range(len(trees))]
        y = [np.asarray(trees[i], np.float32)[1:] for i in range(len(trees))]
        t = [np.asarray(ti, np.float32) for ti in data["t"]]

        seq_len = np.array([len(xi) for xi in x])
        max_len = int(seq_len.max())
        B = len(x)
        L1 = max_len + 1
        nx, ny, nt = self.nx, self.ny, self.nt
        c = self.c_total

        # host-side zero padding + mask (the torch module also does this in numpy)
        x_padded = np.zeros((B, max_len, nx), np.float32)
        y_padded = np.zeros((B, max_len, ny), np.float32)
        t_padded = np.zeros((B, L1, nt), np.float32)
        mask = np.zeros((B, max_len), bool)
        for i in range(B):
            x_padded[i, :seq_len[i]] = x[i]
            y_padded[i, :seq_len[i]] = y[i]
            t_padded[i, :seq_len[i] + 1] = t[i]
            mask[i, :seq_len[i]] = True

        # y[..., sub_dim] = x[..., sub_dim] - y[..., sub_dim]  (host numpy, like torch)
        if self.sub_dim:
            sd = np.asarray(self.sub_dim)
            y_padded[..., sd] = x_padded[..., sd] - y_padded[..., sd]

        # Build ONE lane-dense channel-major slab (c_total, n_pad):
        #   rows [0, nx) -> x ; [nx, nx+ny) -> y ; [nx+ny, c_total) -> t
        # Columns index (batch, step) with step in [0, max_len]; x/y get a zero
        # column at step == max_len so they share t's (max_len+1)-long axis.
        N = B * L1
        resident = fit and (c * _round_up(N, _LANE) * 4) <= _RESIDENT_MAX_BYTES
        if resident:
            tile_n, num_tiles, n_pad = None, 1, _round_up(N, _LANE)
        else:
            tile_n, num_tiles, n_pad = _choose_tiling(c, N)

        merged = np.zeros((c, n_pad), np.float32)
        xT = np.zeros((nx, B, L1), np.float32)
        xT[:, :, :max_len] = np.transpose(x_padded, (2, 0, 1))
        merged[:nx, :N] = xT.reshape(nx, N)
        yT = np.zeros((ny, B, L1), np.float32)
        yT[:, :, :max_len] = np.transpose(y_padded, (2, 0, 1))
        merged[nx:nx + ny, :N] = yT.reshape(ny, N)
        merged[nx + ny:, :N] = np.transpose(t_padded, (2, 0, 1)).reshape(nt, N)

        merged_dev = jnp.asarray(merged)

        # Per-channel sample counts: the torch reference fits on the zero-padded
        # tensors, so padded positions up to max_len ARE counted; only the extra
        # alignment columns (exact zeros) are excluded.
        cnt = np.full((c, 1), float(B * max_len), np.float32)
        cnt[nx + ny:, 0] = float(N)

        if fit:
            if resident:
                out, loc, scale = scaler_fit_transform_resident(
                    merged_dev, jnp.asarray(cnt))
                self._set_stats(loc, scale)
            else:
                psum, pssq = scaler_partial_stats(merged_dev, tile_n=tile_n)
                loc_np, scale_np = _combine_stats(psum, pssq, cnt)
                self._set_stats(loc_np, scale_np)
                out = scaler_transform(merged_dev, self._loc, self._inv,
                                       tile_n=tile_n)
        else:
            out = scaler_transform(merged_dev, self._loc, self._inv,
                                   tile_n=tile_n)

        # Unpack with a SINGLE transpose (B, L1, C) + cheap slices.
        out_cl = out[:, :N].reshape(c, B, L1)
        out_blc = jnp.transpose(out_cl, (1, 2, 0))
        x_out = out_blc[:, :max_len, :nx]
        y_out = out_blc[:, :max_len, nx:nx + ny]
        t_out = out_blc[:, :, nx + ny:]

        # torch returns seq_len as a CPU int64 tensor -> keep as numpy int64
        return (x_out, y_out, t_out, seq_len.astype(np.int64), jnp.asarray(mask))


# --------------------------------- main ------------------------------------ #

if __name__ == "__main__":
    key = jax.random.PRNGKey(0)
    nx = ny = 4
    nt = 1
    lengths = [9, 7, 5]          # tree lengths -> x/y lengths 8, 6, 4 ; max_len = 8
    sub_dim = [0]

    trees, ts = [], []
    for L in lengths:
        key, k1, k2 = jax.random.split(key, 3)
        trees.append(np.asarray(jax.random.normal(k1, (L, nx), jnp.float32)))
        ts.append(np.asarray(jax.random.normal(k2, (L, nt), jnp.float32)))
    data = {"x": trees, "t": ts}

    pre = Preprocess(nx, ny, nt, sub_dim=sub_dim)
    x_p, y_p, t_p, seq_len, mask = pre.transform(data, fit=True)        # resident fit
    jax.block_until_ready((x_p, y_p, t_p, mask))

    x_p2, y_p2, t_p2, _, _ = pre.transform(data, fit=False)             # transform-only
    jax.block_until_ready((x_p2, y_p2, t_p2))

    # ---- numpy reference check (same semantics as the torch module) ----
    xs = [tr[:-1] for tr in trees]
    ys = [tr[1:] for tr in trees]
    sl = np.array([len(xi) for xi in xs])
    ml = int(sl.max())
    B = len(xs)
    xp = np.zeros((B, ml, nx), np.float32)
    yp = np.zeros((B, ml, ny), np.float32)
    tp = np.zeros((B, ml + 1, nt), np.float32)
    mk = np.zeros((B, ml), bool)
    for i in range(B):
        xp[i, :sl[i]] = xs[i]
        yp[i, :sl[i]] = ys[i]
        tp[i, :sl[i] + 1] = ts[i]
        mk[i, :sl[i]] = True
    yp[..., sub_dim] = xp[..., sub_dim] - yp[..., sub_dim]

    def ref_fit_transform(a):
        loc = a.mean(axis=(0, 1))
        scale = a.std(axis=(0, 1), ddof=1)   # torch.std default: unbiased
        return (a - loc) / scale

    rx, ry, rt = ref_fit_transform(xp), ref_fit_transform(yp), ref_fit_transform(tp)

    assert np.allclose(np.asarray(x_p), rx, rtol=1e-4, atol=1e-4)
    assert np.allclose(np.asarray(y_p), ry, rtol=1e-4, atol=1e-4)
    assert np.allclose(np.asarray(t_p), rt, rtol=1e-4, atol=1e-4)
    assert np.allclose(np.asarray(x_p2), np.asarray(x_p), rtol=1e-4, atol=1e-4)
    assert np.allclose(np.asarray(y_p2), np.asarray(y_p), rtol=1e-4, atol=1e-4)
    assert np.allclose(np.asarray(t_p2), np.asarray(t_p), rtol=1e-4, atol=1e-4)
    assert np.array_equal(np.asarray(mask), mk)
    assert np.array_equal(seq_len, sl.astype(np.int64))

    # ---- directly exercise the multi-tile fallback machinery (small tiles) ----
    c_t, tile_t, ntile_t = 5, 128, 3
    npad_t = tile_t * ntile_t
    key, ks = jax.random.split(key)
    slab_np = np.asarray(jax.random.normal(ks, (c_t, npad_t), jnp.float32)) * 3.0 + 1.5
    cnt_t = np.full((c_t, 1), float(npad_t), np.float32)

    psum, pssq = scaler_partial_stats(jnp.asarray(slab_np), tile_n=tile_t)
    loc_t, scale_t = _combine_stats(psum, pssq, cnt_t)
    ref_loc = slab_np.mean(axis=1)
    ref_scale = slab_np.std(axis=1, ddof=1)
    assert np.allclose(loc_t, ref_loc, rtol=1e-4, atol=1e-4)
    assert np.allclose(scale_t, ref_scale, rtol=1e-4, atol=1e-4)

    out_t = scaler_transform(jnp.asarray(slab_np),
                             jnp.asarray(loc_t.reshape(-1, 1)),
                             jnp.asarray((1.0 / scale_t).astype(np.float32).reshape(-1, 1)),
                             tile_n=tile_t)
    ref_tr = (slab_np - ref_loc[:, None]) / ref_scale[:, None]
    assert np.allclose(np.asarray(out_t), ref_tr, rtol=1e-4, atol=1e-4)

    print("KERNEL_OK")
</pallas_src>

<mosaic_0001>
module attributes {stable_mosaic.version = 11 : i64} {
  func.func @_fit_resident_kernel(%arg0: i32, %arg1: memref<9x128xf32, #tpu.memory_space<any>>, %arg2: memref<9x1xf32, #tpu.memory_space<vmem>>, %arg3: memref<9x128xf32, #tpu.memory_space<any>>, %arg4: memref<9x1xf32, #tpu.memory_space<vmem>>, %arg5: memref<9x1xf32, #tpu.memory_space<vmem>>, %arg6: memref<9x128xf32, #tpu.memory_space<vmem>>, %arg7: memref<!tpu.dma_semaphore, #tpu.memory_space<semaphore_mem>>) attributes {dimension_semantics = [#tpu.dimension_semantics<arbitrary>], iteration_bounds = array<i64: 1>, scalar_prefetch = 0 : i64, scratch_operands = 2 : i64, tpu.core_type = #tpu.core_type<tc>, window_params = [{}, {pipeline_mode = #tpu.pipeline_mode<synchronous>, transform_indices = @transform_1, window_bounds = array<i64: 9, 1>}, {}, {pipeline_mode = #tpu.pipeline_mode<synchronous>, transform_indices = @transform_3, window_bounds = array<i64: 9, 1>}, {pipeline_mode = #tpu.pipeline_mode<synchronous>, transform_indices = @transform_4, window_bounds = array<i64: 9, 1>}]} {
    tpu.enqueue_dma source(%arg1 : memref<9x128xf32, #tpu.memory_space<any>>) target(%arg6 : memref<9x128xf32, #tpu.memory_space<vmem>>) target_semaphore(%arg7 : memref<!tpu.dma_semaphore, #tpu.memory_space<semaphore_mem>>)
    tpu.wait_dma2 semaphore(%arg7 : memref<!tpu.dma_semaphore, #tpu.memory_space<semaphore_mem>>) src(%arg1 : memref<9x128xf32, #tpu.memory_space<any>>) dst(%arg6 : memref<9x128xf32, #tpu.memory_space<vmem>>)
    %c0 = arith.constant 0 : index
    %c0_0 = arith.constant 0 : index
    %0 = vector.load %arg6[%c0, %c0_0] : memref<9x128xf32, #tpu.memory_space<vmem>>, vector<9x128xf32>
    %c0_1 = arith.constant 0 : index
    %c0_2 = arith.constant 0 : index
    %1 = vector.load %arg2[%c0_1, %c0_2] : memref<9x1xf32, #tpu.memory_space<vmem>>, vector<9x1xf32>
    %cst = arith.constant dense<0.000000e+00> : vector<9xf32>
    %2 = vector.multi_reduction <add>, %0, %cst [1] : vector<9x128xf32> to vector<9xf32>
    %3 = vector.shape_cast %2 : vector<9xf32> to vector<9x1xf32>
    %4 = arith.divf %3, %1 : vector<9x1xf32>
    %5 = vector.broadcast %4 : vector<9x1xf32> to vector<9x128xf32>
    %6 = arith.subf %0, %5 : vector<9x128xf32>
    %7 = arith.mulf %6, %6 : vector<9x128xf32>
    %cst_3 = arith.constant dense<0.000000e+00> : vector<9xf32>
    %8 = vector.multi_reduction <add>, %7, %cst_3 [1] : vector<9x128xf32> to vector<9xf32>
    %9 = vector.shape_cast %8 : vector<9xf32> to vector<9x1xf32>
    %cst_4 = arith.constant 1.280000e+02 : f32
    %10 = vector.broadcast %cst_4 : f32 to vector<9x1xf32>
    %11 = arith.subf %10, %1 : vector<9x1xf32>
    %12 = arith.mulf %4, %4 : vector<9x1xf32>
    %13 = arith.mulf %11, %12 : vector<9x1xf32>
    %14 = arith.subf %9, %13 : vector<9x1xf32>
    %cst_5 = arith.constant 1.000000e+00 : f32
    %15 = vector.broadcast %cst_5 : f32 to vector<9x1xf32>
    %16 = arith.subf %1, %15 : vector<9x1xf32>
    %17 = arith.divf %14, %16 : vector<9x1xf32>
    %18 = math.sqrt %17 : vector<9x1xf32>
    %19 = tpu.reciprocal %18 : vector<9x1xf32> -> vector<9x1xf32>
    %c0_6 = arith.constant 0 : index
    %c0_7 = arith.constant 0 : index
    %20 = vector.load %arg4[%c0_6, %c0_7] : memref<9x1xf32, #tpu.memory_space<vmem>>, vector<9x1xf32>
    tpu.vector_store %arg4[%c0_6, %c0_7], %4 {strides = array<i32>} : memref<9x1xf32, #tpu.memory_space<vmem>>, vector<9x1xf32>,
    %c0_8 = arith.constant 0 : index
    %c0_9 = arith.constant 0 : index
    %21 = vector.load %arg5[%c0_8, %c0_9] : memref<9x1xf32, #tpu.memory_space<vmem>>, vector<9x1xf32>
    tpu.vector_store %arg5[%c0_8, %c0_9], %18 {strides = array<i32>} : memref<9x1xf32, #tpu.memory_space<vmem>>, vector<9x1xf32>,
    %22 = vector.broadcast %19 : vector<9x1xf32> to vector<9x128xf32>
    %23 = arith.mulf %6, %22 : vector<9x128xf32>
    %c0_10 = arith.constant 0 : index
    %c0_11 = arith.constant 0 : index
    %24 = vector.load %arg6[%c0_10, %c0_11] : memref<9x128xf32, #tpu.memory_space<vmem>>, vector<9x128xf32>
    tpu.vector_store %arg6[%c0_10, %c0_11], %23 {strides = array<i32>} : memref<9x128xf32, #tpu.memory_space<vmem>>, vector<9x128xf32>,
    tpu.enqueue_dma source(%arg6 : memref<9x128xf32, #tpu.memory_space<vmem>>) target(%arg3 : memref<9x128xf32, #tpu.memory_space<any>>) target_semaphore(%arg7 : memref<!tpu.dma_semaphore, #tpu.memory_space<semaphore_mem>>)
    tpu.wait_dma2 semaphore(%arg7 : memref<!tpu.dma_semaphore, #tpu.memory_space<semaphore_mem>>) src(%arg6 : memref<9x128xf32, #tpu.memory_space<vmem>>) dst(%arg3 : memref<9x128xf32, #tpu.memory_space<any>>)
    return
  }
  func.func @transform_1(%arg0: i32) -> (i32, i32) {
    %c0_i32 = arith.constant 0 : i32
    %c0_i32_0 = arith.constant 0 : i32
    %c0_i32_1 = arith.constant 0 : i32
    return %c0_i32, %c0_i32_0 : i32, i32
  }
  func.func @transform_3(%arg0: i32) -> (i32, i32) {
    %c0_i32 = arith.constant 0 : i32
    %c0_i32_0 = arith.constant 0 : i32
    %c0_i32_1 = arith.constant 0 : i32
    return %c0_i32, %c0_i32_0 : i32, i32
  }
  func.func @transform_4(%arg0: i32) -> (i32, i32) {
    %c0_i32 = arith.constant 0 : i32
    %c0_i32_0 = arith.constant 0 : i32
    %c0_i32_1 = arith.constant 0 : i32
    return %c0_i32, %c0_i32_0 : i32, i32
  }
}

</mosaic_0001>

<llo_original>
// kernel: scaler_fit_transform_resident.1
$region0: #{scaler_fit_transform_resident.1}
  #allocation0 [shape = 'u32[]', space=smem, size = 0x4, offset = 0x4, fixed_abs, tag = 'smem constant byte address 0x4 - core index']
  #allocation1 [shape = 'u32[144,128]{1,0:T(1,128)}', space=vmem, size = 0x12000, scoped, tag = 'internal scratch']
  #allocation2 [shape = 'f32[9,128]{1,0:T(8,128)}', space=vmem, size = 0x2000, scoped, tag = 'scratch operand']
  #allocation3 [shape = 's32[1]{0}', space=sflag, size = 0x4, scoped, tag = 'scratch operand']
  #allocation4 [shape = 's32[]', space=sflag, size = 0x4, offset = 0, fixed_abs, tag = 'sflag constant byte address 0x0 - dummy sync flag']
  #allocation5 [shape = 's32[]', space=sflag, size = 0x4, offset = 0, fixed_abs, tag = 'sflag constant byte address 0x0 - dummy sync flag']
  %s0 = inlined_call_operand.vmem [shape: f32[9,128], index: 0, kind: input, shape index: {}, may-alias: {0,2}]
  %s1 = inlined_call_operand.vmem [shape: f32[9,1], index: 1, kind: input, shape index: {}]
  %s2 = inlined_call_operand.vmem [shape: f32[9,128], index: 2, kind: output, shape index: {0}, may-alias: {0,2}]
  %s3 = inlined_call_operand.vmem [shape: f32[9,1], index: 3, kind: output, shape index: {1}]
  %s4 = inlined_call_operand.vmem [shape: f32[9,1], index: 4, kind: output, shape index: {2}]
  %5 = xla_tuple %s2, %s3, %s4
  %s6 = sld [smem:[#allocation0]]
  $region96: #{scaler_fit_transform_resident.1} parent=0
    _
  %s8 = ssub.s32 1, %s6
  %s9 = scalar_select 0, %s8, %s6
  // Predicated region
  $region2: #{scaler_fit_transform_resident.1} parent=0 // pred_check
    _
  $region3: #{scaler_fit_transform_resident.1} parent=0 // pred_check_branch
    %11 = sbr.rel (0) target = $region5
  $region4: #{scaler_fit_transform_resident.1} parent=0 // pred_region
    _
  $region5: #{scaler_fit_transform_resident.1} parent=0 // pred_fallthru
    _
  %p13 = scmp.lt.u32.totalorder 9, 8
  %p14 = pneg %p13
  // Predicated region
  $region6: #{scaler_fit_transform_resident.1} parent=0 // pred_check
    _
  $region7: #{scaler_fit_transform_resident.1} parent=0 // pred_check_branch
    %16 = sbr.rel (%p13) target = $region9
  $region8: #{scaler_fit_transform_resident.1} parent=0 // pred_region
    %s32 = sand.u32 9, 7
    %p33 = scmp.eq.s32.totalorder %s32, 0
    %p34 = pneg %p33
    // Predicated region
    $region21: #{scaler_fit_transform_resident.1} parent=8 // pred_check
      _
    $region22: #{scaler_fit_transform_resident.1} parent=8 // pred_check_branch
      %36 = sbr.rel (%p33) target = $region24
    $region23: #{scaler_fit_transform_resident.1} parent=8 // pred_region
      %s37 = sand.u32 9, 7
      %s38 = ssub.s32 9, %s37
      %s39 = scalar_lea.vmem %s0, %s38
      %s40 = ssub.s32 9, %s37
      %s41 = scalar_lea.vmem [#allocation2], %s40
      loop: start=0, step=1, limit=1
      $region25: #{scaler_fit_transform_resident.1} parent=23 // loop_pre_header
        _
      $region26: #{scaler_fit_transform_resident.1} parent=23 // loop_header
        %s43 = sphi 0, %s47
        %p44 = scmp.ge.s32.totalorder %s43, 1
        %s48 = sphi %s0, %s0
        %s49 = sphi [#allocation2], [#allocation2]
      $region27: #{scaler_fit_transform_resident.1} parent=23 // loop_header_branch
        %46 = sbr.rel (%p44) target = $region31
      $region28: #{scaler_fit_transform_resident.1} parent=23 // loop_body
        %v50 = vld [vmem:[%s48] sm:$0xff]
        %51 = vst [vmem:[%s49] sm:$0xff] %v50
      $region29: #{scaler_fit_transform_resident.1} parent=23 // loop_footer
        %s47 = sadd.s32 1, %s43
      $region30: #{scaler_fit_transform_resident.1} parent=23 // loop_footer_branch
        %42 = sbr.rel target = $region26
      $region31: #{scaler_fit_transform_resident.1} parent=23 // loop_exit
        _
      %s52 = sshll.u32 1, %s37
      %s53 = ssub.s32 %s52, 1
      loop: start=0, step=1, limit=1
      $region32: #{scaler_fit_transform_resident.1} parent=23 // loop_pre_header
        _
      $region33: #{scaler_fit_transform_resident.1} parent=23 // loop_header
        %s55 = sphi 0, %s59
        %p56 = scmp.ge.s32.totalorder %s55, 1
        %s60 = sphi %s39, %s39
        %s61 = sphi %s41, %s41
      $region34: #{scaler_fit_transform_resident.1} parent=23 // loop_header_branch
        %58 = sbr.rel (%p56) target = $region38
      $region35: #{scaler_fit_transform_resident.1} parent=23 // loop_body
        %v62 = vld [vmem:[%s60] sm:%s53]
        %63 = vst [vmem:[%s61] sm:%s53] %v62
      $region36: #{scaler_fit_transform_resident.1} parent=23 // loop_footer
        %s59 = sadd.s32 1, %s55
      $region37: #{scaler_fit_transform_resident.1} parent=23 // loop_footer_branch
        %54 = sbr.rel target = $region33
      $region38: #{scaler_fit_transform_resident.1} parent=23 // loop_exit
        _
    $region24: #{scaler_fit_transform_resident.1} parent=8 // pred_fallthru
      _
  $region9: #{scaler_fit_transform_resident.1} parent=0 // pred_fallthru
    _
  // Predicated region
  $region10: #{scaler_fit_transform_resident.1} parent=0 // pred_check
    %p17 = pneg %p13
  $region11: #{scaler_fit_transform_resident.1} parent=0 // pred_check_branch
    %19 = sbr.rel (%p17) target = $region13
  $region12: #{scaler_fit_transform_resident.1} parent=0 // pred_region
    %s20 = sshll.u32 1, 9
    %s21 = ssub.s32 %s20, 1
    loop: start=0, step=1, limit=1
    $region14: #{scaler_fit_transform_resident.1} parent=12 // loop_pre_header
      _
    $region15: #{scaler_fit_transform_resident.1} parent=12 // loop_header
      %s23 = sphi 0, %s27
      %p24 = scmp.ge.s32.totalorder %s23, 1
      %s28 = sphi %s0, %s0
      %s29 = sphi [#allocation2], [#allocation2]
    $region16: #{scaler_fit_transform_resident.1} parent=12 // loop_header_branch
      %26 = sbr.rel (%p24) target = $region20
    $region17: #{scaler_fit_transform_resident.1} parent=12 // loop_body
      %v30 = vld [vmem:[%s28] sm:%s21]
      %31 = vst [vmem:[%s29] sm:%s21] %v30
    $region18: #{scaler_fit_transform_resident.1} parent=12 // loop_footer
      %s27 = sadd.s32 1, %s23
    $region19: #{scaler_fit_transform_resident.1} parent=12 // loop_footer_branch
      %22 = sbr.rel target = $region15
    $region20: #{scaler_fit_transform_resident.1} parent=12 // loop_exit
      _
  $region13: #{scaler_fit_transform_resident.1} parent=0 // pred_fallthru
    _
  // Predicated region
  $region39: #{scaler_fit_transform_resident.1} parent=0 // pred_check
    _
  $region40: #{scaler_fit_transform_resident.1} parent=0 // pred_check_branch
    %66 = sbr.rel (0) target = $region42
  $region41: #{scaler_fit_transform_resident.1} parent=0 // pred_region
    %67 = vsyncadd [#allocation3], 144
  $region42: #{scaler_fit_transform_resident.1} parent=0 // pred_fallthru
    _
  %s68 = smul.u32 9, 1
  %s69 = sshll.u32 %s68, 4
  %70 = dma.done [#allocation3], %s69
  %v71 = vld [vmem:[#allocation2] sm:$0xff]
  %v72 = vld [vmem:[#allocation2 + $0x8] sm:$0x1]
  %v73 = vld [vmem:[%s1] sm:$0xff]
  %v74 = vld [vmem:[%s1 + $0x8] sm:$0x1]
  %75 = vadd.xlane.f32.xlu0 %v71
  %v76 = vpop.xlane.xlu0 %75
  %vm77 = vcmask 1040384
  %v78 = vsel %vm77, %v72, 0.0
  %79 = vadd.xlane.f32.xlu0 %v78
  %v80 = vpop.xlane.xlu0 %79
  %v81 = vrcp.pop %v73
  %v82 = vmul.f32 %v76, %v81
  %v83 = vrcp.pop %v74
  %v84 = vmul.f32 %v80, %v83
  %86 = vset.pattern.permute.xlu0 0
  %87 = vperm.xlu0 %86, %v82
  %v88 = vpop.permute.xlu0 %87
  %91 = vset.pattern.permute.xlu0 0
  %92 = vperm.xlu0 %91, %v84
  %v93 = vpop.permute.xlu0 %92
  %v95 = vsub.f32 %v71, %v88
  %v96 = vsub.f32 %v72, %v93
  %v97 = vmul.f32 %v95, %v95
  %v98 = vmul.f32 %v96, %v96
  %99 = vadd.xlane.f32.xlu0 %v97
  %v100 = vpop.xlane.xlu0 %99
  %v101 = vsel %vm77, %v98, 0.0
  %102 = vadd.xlane.f32.xlu0 %v101
  %v103 = vpop.xlane.xlu0 %102
  %v104 = vsub.f32 128.0, %v73
  %v105 = vsub.f32 128.0, %v74
  %v106 = vmul.f32 %v82, %v82
  %v107 = vmul.f32 %v84, %v84
  %v108 = vmul.f32 %v104, %v106
  %v109 = vmul.f32 %v105, %v107
  %v110 = vsub.f32 %v100, %v108
  %v111 = vsub.f32 %v103, %v109
  %v112 = vsub.f32 %v73, 1.0
  %v113 = vsub.f32 %v74, 1.0
  %v114 = vrcp.pop %v112
  %v115 = vmul.f32 %v110, %v114
  %v116 = vrcp.pop %v113
  %v117 = vmul.f32 %v111, %v116
  %v118 = vrsqrt.pop %v115
  %v119 = vmul.f32 %v115, %v118
  %vm120 = vcmp.eq.f32.partialorder %v115, inf
  %v121 = vsel %vm120, %v115, %v119
  %vm122 = vcmp.eq.f32.partialorder %v115, 0.0
  %v123 = vand.u32 %v115, 2147483648
  %v124 = vsel %vm122, %v123, %v121
  %v125 = vrsqrt.pop %v117
  %v126 = vmul.f32 %v117, %v125
  %vm127 = vcmp.eq.f32.partialorder %v117, inf
  %v128 = vsel %vm127, %v117, %v126
  %vm129 = vcmp.eq.f32.partialorder %v117, 0.0
  %v130 = vand.u32 %v117, 2147483648
  %v131 = vsel %vm129, %v130, %v128
  %v132 = vrcp.pop %v124
  %v133 = vrcp.pop %v131
  %vm134 = vcmask 7168
  %135 = vst.msk [vmem:[%s3] sm:$0xff] %vm134, %v82
  %vm136 = vcmask 0
  %137 = vst.msk [vmem:[%s3 + $0x8] sm:$0x1] %vm136, %v84
  %138 = vst.msk [vmem:[%s4] sm:$0xff] %vm134, %v124
  %139 = vst.msk [vmem:[%s4 + $0x8] sm:$0x1] %vm136, %v131
  %141 = vset.pattern.permute.xlu0 0
  %142 = vperm.xlu0 %141, %v132
  %v143 = vpop.permute.xlu0 %142
  %146 = vset.pattern.permute.xlu0 0
  %147 = vperm.xlu0 %146, %v133
  %v148 = vpop.permute.xlu0 %147
  %v150 = vmul.f32 %v95, %v143
  %v151 = vmul.f32 %v96, %v148
  %152 = vst [vmem:[#allocation2] sm:$0xff] %v150
  %153 = vst [vmem:[#allocation2 + $0x8] sm:$0x1] %v151
  %p155 = scmp.lt.u32.totalorder 9, 8
  %p156 = pneg %p155
  // Predicated region
  $region43: #{scaler_fit_transform_resident.1} parent=0 // pred_check
    _
  $region44: #{scaler_fit_transform_resident.1} parent=0 // pred_check_branch
    %158 = sbr.rel (%p155) target = $region46
  $region45: #{scaler_fit_transform_resident.1} parent=0 // pred_region
    %s174 = sand.u32 9, 7
    %p175 = scmp.eq.s32.totalorder %s174, 0
    %p176 = pneg %p175
    // Predicated region
    $region58: #{scaler_fit_transform_resident.1} parent=45 // pred_check
      _
    $region59: #{scaler_fit_transform_resident.1} parent=45 // pred_check_branch
      %178 = sbr.rel (%p175) target = $region61
    $region60: #{scaler_fit_transform_resident.1} parent=45 // pred_region
      %s179 = sand.u32 9, 7
      %s180 = ssub.s32 9, %s179
      %s181 = scalar_lea.vmem [#allocation2], %s180
      %s182 = ssub.s32 9, %s179
      %s183 = scalar_lea.vmem %s2, %s182
      loop: start=0, step=1, limit=1
      $region62: #{scaler_fit_transform_resident.1} parent=60 // loop_pre_header
        _
      $region63: #{scaler_fit_transform_resident.1} parent=60 // loop_header
        %s185 = sphi 0, %s189
        %p186 = scmp.ge.s32.totalorder %s185, 1
        %s190 = sphi [#allocation2], [#allocation2]
        %s191 = sphi %s2, %s2
      $region64: #{scaler_fit_transform_resident.1} parent=60 // loop_header_branch
        %188 = sbr.rel (%p186) target = $region68
      $region65: #{scaler_fit_transform_resident.1} parent=60 // loop_body
        %v192 = vld [vmem:[%s190] sm:$0xff]
        %193 = vst [vmem:[%s191] sm:$0xff] %v192
      $region66: #{scaler_fit_transform_resident.1} parent=60 // loop_footer
        %s189 = sadd.s32 1, %s185
      $region67: #{scaler_fit_transform_resident.1} parent=60 // loop_footer_branch
        %184 = sbr.rel target = $region63
      $region68: #{scaler_fit_transform_resident.1} parent=60 // loop_exit
        _
      %s194 = sshll.u32 1, %s179
      %s195 = ssub.s32 %s194, 1
      loop: start=0, step=1, limit=1
      $region69: #{scaler_fit_transform_resident.1} parent=60 // loop_pre_header
        _
      $region70: #{scaler_fit_transform_resident.1} parent=60 // loop_header
        %s197 = sphi 0, %s201
        %p198 = scmp.ge.s32.totalorder %s197, 1
        %s202 = sphi %s181, %s181
        %s203 = sphi %s183, %s183
      $region71: #{scaler_fit_transform_resident.1} parent=60 // loop_header_branch
        %200 = sbr.rel (%p198) target = $region75
      $region72: #{scaler_fit_transform_resident.1} parent=60 // loop_body
        %v204 = vld [vmem:[%s202] sm:%s195]
        %205 = vst [vmem:[%s203] sm:%s195] %v204
      $region73: #{scaler_fit_transform_resident.1} parent=60 // loop_footer
        %s201 = sadd.s32 1, %s197
      $region74: #{scaler_fit_transform_resident.1} parent=60 // loop_footer_branch
        %196 = sbr.rel target = $region70
      $region75: #{scaler_fit_transform_resident.1} parent=60 // loop_exit
        _
    $region61: #{scaler_fit_transform_resident.1} parent=45 // pred_fallthru
      _
  $region46: #{scaler_fit_transform_resident.1} parent=0 // pred_fallthru
    _
  // Predicated region
  $region47: #{scaler_fit_transform_resident.1} parent=0 // pred_check
    %p159 = pneg %p155
  $region48: #{scaler_fit_transform_resident.1} parent=0 // pred_check_branch
    %161 = sbr.rel (%p159) target = $region50
  $region49: #{scaler_fit_transform_resident.1} parent=0 // pred_region
    %s162 = sshll.u32 1, 9
    %s163 = ssub.s32 %s162, 1
    loop: start=0, step=1, limit=1
    $region51: #{scaler_fit_transform_resident.1} parent=49 // loop_pre_header
      _
    $region52: #{scaler_fit_transform_resident.1} parent=49 // loop_header
      %s165 = sphi 0, %s169
      %p166 = scmp.ge.s32.totalorder %s165, 1
      %s170 = sphi [#allocation2], [#allocation2]
      %s171 = sphi %s2, %s2
    $region53: #{scaler_fit_transform_resident.1} parent=49 // loop_header_branch
      %168 = sbr.rel (%p166) target = $region57
    $region54: #{scaler_fit_transform_resident.1} parent=49 // loop_body
      %v172 = vld [vmem:[%s170] sm:%s163]
      %173 = vst [vmem:[%s171] sm:%s163] %v172
    $region55: #{scaler_fit_transform_resident.1} parent=49 // loop_footer
      %s169 = sadd.s32 1, %s165
    $region56: #{scaler_fit_transform_resident.1} parent=49 // loop_footer_branch
      %164 = sbr.rel target = $region52
    $region57: #{scaler_fit_transform_resident.1} parent=49 // loop_exit
      _
  $region50: #{scaler_fit_transform_resident.1} parent=0 // pred_fallthru
    _
  // Predicated region
  $region76: #{scaler_fit_transform_resident.1} parent=0 // pred_check
    _
  $region77: #{scaler_fit_transform_resident.1} parent=0 // pred_check_branch
    %208 = sbr.rel (0) target = $region79
  $region78: #{scaler_fit_transform_resident.1} parent=0 // pred_region
    %209 = vsyncadd [#allocation3], 144
  $region79: #{scaler_fit_transform_resident.1} parent=0 // pred_fallthru
    _
  %s210 = sshll.u32 %s68, 4
  %211 = dma.done [#allocation3], %s210
  // Predicated region
  $region80: #{scaler_fit_transform_resident.1} parent=0 // pred_check
    _
  $region81: #{scaler_fit_transform_resident.1} parent=0 // pred_check_branch
    %213 = sbr.rel (0) target = $region83
  $region82: #{scaler_fit_transform_resident.1} parent=0 // pred_region
    _
  $region83: #{scaler_fit_transform_resident.1} parent=0 // pred_fallthru
    _
  // Predicated region
  $region84: #{scaler_fit_transform_resident.1} parent=0 // pred_check
    _
  $region85: #{scaler_fit_transform_resident.1} parent=0 // pred_check_branch
    %215 = sbr.rel (0) target = $region87
  $region86: #{scaler_fit_transform_resident.1} parent=0 // pred_region
    _
  $region87: #{scaler_fit_transform_resident.1} parent=0 // pred_fallthru
    _
  // Predicated region
  $region88: #{scaler_fit_transform_resident.1} parent=0 // pred_check
    _
  $region89: #{scaler_fit_transform_resident.1} parent=0 // pred_check_branch
    %217 = sbr.rel (0) target = $region91
  $region90: #{scaler_fit_transform_resident.1} parent=0 // pred_region
    _
  $region91: #{scaler_fit_transform_resident.1} parent=0 // pred_fallthru
    _
  // Predicated region
  $region92: #{scaler_fit_transform_resident.1} parent=0 // pred_check
    _
  $region93: #{scaler_fit_transform_resident.1} parent=0 // pred_check_branch
    %219 = sbr.rel (0) target = $region95
  $region94: #{scaler_fit_transform_resident.1} parent=0 // pred_region
    _
  $region95: #{scaler_fit_transform_resident.1} parent=0 // pred_fallthru
    _
  %220 = vsyncmov [#allocation3]
  %s221 = vpop.sfrf %220
  %p222 = scmp.eq.s32.totalorder %s221, 0
  %p223 = pneg %p222
  %225 = shalt.err (%p223)

</llo_original>
